<compile_context>
chip_gen: v6e
topology: v6e:2x2x1
jax: 0.10.0
libtpu: 0.0.40
codegen_flags: <defaults>
</compile_context>

<pallas_src>
import functools
import math

import jax
import jax.numpy as jnp
from jax import lax
from jax.experimental import pallas as pl
from jax.experimental.pallas import tpu as pltpu

LN_EPS = 1e-5


def _layer_norm(v, gamma, beta):
    mu = jnp.mean(v, axis=-1, keepdims=True)
    var = jnp.mean((v - mu) ** 2, axis=-1, keepdims=True)
    return (v - mu) * lax.rsqrt(var + LN_EPS) * gamma + beta


def _nbytes(shape, dtype):
    return int(math.prod(shape)) * jnp.dtype(dtype).itemsize


def _vmem_cap_bytes():
    try:
        return int(pltpu.get_tpu_info().vmem_capacity_bytes)
    except Exception:
        return 64 * 1024 * 1024   # conservative (v7x per-TC)


def _vmem_limit_bytes(est_bytes):
    want = int(1.25 * est_bytes) + (2 << 20)
    return int(min(_vmem_cap_bytes(), max(want, 32 << 20)))


def _mosaic_params(dim_sem, est_bytes):
    return pltpu.CompilerParams(dimension_semantics=dim_sem,
                                vmem_limit_bytes=_vmem_limit_bytes(est_bytes))


def _max_row_tile():
    # Smaller row tiles on small-VMEM parts (v7x: 64 MiB physical per TC).
    return 256 if _vmem_cap_bytes() < (100 << 20) else 512


def _row_tile(rows):
    """Row tile + padded row count.  Pads up to a 128-multiple instead of falling
    back to tiny tiles (MXU M underfill) or the full row count (VMEM blow-up)."""
    cap = _max_row_tile()
    cands = tuple(t for t in (512, 256, 128) if t <= cap)
    for t in cands:
        if rows % t == 0:
            return t, rows
    rows_p = ((rows + 127) // 128) * 128
    for t in cands:
        if rows_p % t == 0:
            return t, rows_p
    return 128, rows_p


def _col_tile(cols):
    for t in (1024, 512, 256, 128):
        if cols % t == 0:
            return t
    return cols


# ---------------------------------------------------------------------------
# pl.Buffered(1) support probe (single-buffer grid-invariant weights).
# ---------------------------------------------------------------------------
_BUFFERED1_OK = None


def _buffered_one_supported():
    global _BUFFERED1_OK
    if _BUFFERED1_OK is not None:
        return _BUFFERED1_OK

    def _probe_kernel(a_ref, b_ref, o_ref, acc_ref):
        @pl.when(pl.program_id(1) == 0)
        def _():
            acc_ref[...] = jnp.zeros_like(acc_ref)
        acc_ref[...] += jnp.dot(a_ref[...], b_ref[...],
                                preferred_element_type=jnp.float32)

        @pl.when(pl.program_id(1) == pl.num_programs(1) - 1)
        def _():
            o_ref[...] = acc_ref[...]

    try:
        probe = pl.pallas_call(
            _probe_kernel,
            out_shape=jax.ShapeDtypeStruct((8, 128), jnp.float32),
            grid_spec=pltpu.PrefetchScalarGridSpec(
                num_scalar_prefetch=0,
                grid=(1, 2),
                in_specs=[pl.BlockSpec((8, 128), lambda i, j: (0, 0),
                                       pipeline_mode=pl.Buffered(1)),
                          pl.BlockSpec((128, 128), lambda i, j: (j, 0))],
                out_specs=pl.BlockSpec((8, 128), lambda i, j: (i, 0)),
                scratch_shapes=[pltpu.VMEM((8, 128), jnp.float32)]),
            compiler_params=pltpu.CompilerParams(
                dimension_semantics=("parallel", "arbitrary")),
        )
        jax.block_until_ready(probe(jnp.ones((8, 128), jnp.float32),
                                    jnp.ones((256, 128), jnp.float32)))
        _BUFFERED1_OK = True
    except Exception:
        _BUFFERED1_OK = False
    return _BUFFERED1_OK


def _invariant_spec(block_shape, index_map):
    """BlockSpec for a grid-invariant block; single-buffered when supported."""
    if _buffered_one_supported():
        return pl.BlockSpec(block_shape, index_map, pipeline_mode=pl.Buffered(1))
    return pl.BlockSpec(block_shape, index_map)


# ---------------------------------------------------------------------------
# kernel A: fused QKV projection, row-tiled over B*S and column-tiled over 3D
# ---------------------------------------------------------------------------
def qkv_proj_kernel(x_ref, w_ref, b_ref, out_ref, *, mxu_dtype):
    x = x_ref[...].astype(mxu_dtype)                              # (tr, D)
    out = jnp.dot(x, w_ref[...], preferred_element_type=jnp.float32)
    out = out + b_ref[...]                                        # (1, tn) broadcast, f32
    out_ref[...] = out.astype(out_ref.dtype)


# ---------------------------------------------------------------------------
# kernel B (fast path): all heads of one batch element per grid step, reading
# Q/K/V directly out of the (R, 3D) qkv activation and writing (S, D) context.
# ---------------------------------------------------------------------------
def attention_heads_kernel(q_ref, k_ref, v_ref, o_ref, *, num_heads, dk, approx_recip):
    # q_ref / k_ref / v_ref: (S, D) column slabs of qkv2d; heads are contiguous
    # 128-aligned dk-wide column slices (fast path requires dk % 128 == 0).
    # TODO(synk): kv-blocked online softmax for long S (bounds (S, S) f32 VMEM).
    for h in range(num_heads):
        lo, hi = h * dk, (h + 1) * dk
        q = q_ref[:, lo:hi]                                       # (S, dk), scale pre-folded
        k = k_ref[:, lo:hi]
        v = v_ref[:, lo:hi]
        s = lax.dot_general(q, k, (((1,), (1,)), ((), ())),
                            preferred_element_type=jnp.float32)   # (S, S)
        s = s - jnp.max(s, axis=-1, keepdims=True)
        p = jnp.exp(s)
        p = p * pl.reciprocal(jnp.sum(p, axis=-1, keepdims=True), approx=approx_recip)
        ctx = jnp.dot(p.astype(v.dtype), v, preferred_element_type=jnp.float32)
        o_ref[:, lo:hi] = ctx.astype(o_ref.dtype)                 # lane-aligned store


# ---------------------------------------------------------------------------
# kernel B (fallback): one (batch, head) per grid step (dk not 128-aligned)
# ---------------------------------------------------------------------------
def attention_head_kernel(q_ref, k_ref, v_ref, o_ref, *, approx_recip):
    q = q_ref[0, 0]                                               # (S, dk)
    k = k_ref[0, 0]
    v = v_ref[0, 0]
    s = lax.dot_general(q, k, (((1,), (1,)), ((), ())),
                        preferred_element_type=jnp.float32)       # (S, S)
    s = s - jnp.max(s, axis=-1, keepdims=True)
    p = jnp.exp(s)
    p = p * pl.reciprocal(jnp.sum(p, axis=-1, keepdims=True), approx=approx_recip)
    ctx = jnp.dot(p.astype(v.dtype), v, preferred_element_type=jnp.float32)
    o_ref[0, 0] = ctx.astype(o_ref.dtype)


# ---------------------------------------------------------------------------
# kernel C: out-proj + LN1 + residual + FFN + LN2 + residual, d_ff tiled with a
# trailing "arbitrary" reduction axis and a VMEM f32 accumulator.
# ---------------------------------------------------------------------------
def post_attn_kernel(ctx_ref, x_ref, wo_ref, vec_ref, w1_ref, b1_ref, w2_ref,
                     out_ref, x1_ref, acc_ref, *, mxu_dtype):
    j = pl.program_id(1)

    @pl.when(j == 0)
    def _():
        bo, g1, be1 = vec_ref[0:1], vec_ref[1:2], vec_ref[2:3]
        attn = jnp.dot(ctx_ref[...], wo_ref[...],
                       preferred_element_type=jnp.float32) + bo
        # x1 = LayerNorm1(attn) + x   (post-sublayer LN, matching the module)
        x1_ref[...] = _layer_norm(attn, g1, be1) + x_ref[...]
        acc_ref[...] = jnp.zeros_like(acc_ref)

    # Streamed d_ff tile: relu(x1 @ w1[:, j]) @ w2[j, :] accumulated in f32.
    h = jnp.dot(x1_ref[...].astype(mxu_dtype), w1_ref[...],
                preferred_element_type=jnp.float32) + b1_ref[...]
    h = jnp.maximum(h, 0.0)
    acc_ref[...] += jnp.dot(h.astype(mxu_dtype), w2_ref[...],
                            preferred_element_type=jnp.float32)

    @pl.when(j == pl.num_programs(1) - 1)
    def _():
        b2, g2, be2 = vec_ref[3:4], vec_ref[4:5], vec_ref[5:6]
        y = acc_ref[...] + b2
        # out = LayerNorm2(ffn) + x1
        out_ref[...] = (_layer_norm(y, g2, be2) + x1_ref[...]).astype(out_ref.dtype)


# ---------------------------------------------------------------------------
# wrapper
# ---------------------------------------------------------------------------
def encoder_block(x, params, num_heads, *, mxu_dtype=jnp.bfloat16,
                  ff_tile=None, approx_recip=False):
    B, S, D = x.shape
    H = num_heads
    assert D % H == 0
    dk = D // H
    dff = params["w1"].shape[1]
    f32 = jnp.float32
    scale = 1.0 / math.sqrt(dk)

    # ---- one-time wrapper-side parameter packing / casting (trace-time) ----
    # 1/sqrt(dk) folded into the Q projection weight AND bias.
    wqkv = jnp.concatenate([params["wq"] * scale, params["wk"], params["wv"]],
                           axis=1).astype(mxu_dtype)                     # (D, 3D)
    bqkv = jnp.concatenate([params["bq"] * scale, params["bk"], params["bv"]],
                           axis=1).astype(f32)                           # (1, 3D)
    wo = params["wo"].astype(mxu_dtype)
    w1 = params["w1"].astype(mxu_dtype)
    w2 = params["w2"].astype(mxu_dtype)
    b1 = params["b1"].astype(f32)
    vecs = jnp.concatenate([params["bo"], params["g1"], params["be1"],
                            params["b2"], params["g2"], params["be2"]],
                           axis=0).astype(f32)                           # (6, D)

    R = B * S
    tr, R_pad = _row_tile(R)
    n_row = R_pad // tr

    x2d = x.reshape(R, D).astype(f32)
    if R_pad != R:
        # Pad rows up to a 128-multiple (keeps the MXU M dimension full); the
        # padded rows are garbage and get sliced off at the end.
        x2d = jnp.pad(x2d, ((0, R_pad - R), (0, 0)))

    # ---- kernel A: fused QKV projection (row-tiled + N-tiled weight stream) ----
    tn = _col_tile(3 * D)
    n_col = (3 * D) // tn
    est_a = (2 * _nbytes((tr, D), f32) + 2 * _nbytes((D, tn), mxu_dtype)
             + 2 * _nbytes((1, tn), f32) + 2 * _nbytes((tr, tn), mxu_dtype))
    qkv2d = pl.pallas_call(
        functools.partial(qkv_proj_kernel, mxu_dtype=mxu_dtype),
        out_shape=jax.ShapeDtypeStruct((R_pad, 3 * D), mxu_dtype),
        grid_spec=pltpu.PrefetchScalarGridSpec(
            num_scalar_prefetch=0,
            grid=(n_row, n_col),
            in_specs=[pl.BlockSpec((tr, D), lambda i, j: (i, 0)),
                      pl.BlockSpec((D, tn), lambda i, j: (0, j)),
                      pl.BlockSpec((1, tn), lambda i, j: (0, j))],
            out_specs=pl.BlockSpec((tr, tn), lambda i, j: (i, j))),
        compiler_params=_mosaic_params(("parallel", "parallel"), est_a),
    )(x2d, wqkv, bqkv)

    # ---- kernel B: attention (no XLA head split/merge when dk is 128-aligned) ----
    fast_attn = (dk % 128 == 0) and (S % 8 == 0)
    if fast_attn:
        est_b = (2 * 3 * _nbytes((S, D), mxu_dtype)
                 + 2 * _nbytes((S, D), mxu_dtype)
                 + 4 * _nbytes((S, S), f32))
        ctx2d = pl.pallas_call(
            functools.partial(attention_heads_kernel, num_heads=H, dk=dk,
                              approx_recip=approx_recip),
            out_shape=jax.ShapeDtypeStruct((R_pad, D), mxu_dtype),
            grid_spec=pltpu.PrefetchScalarGridSpec(
                num_scalar_prefetch=0,
                grid=(B,),
                in_specs=[pl.BlockSpec((S, D), lambda b: (b, 0)),   # Q columns
                          pl.BlockSpec((S, D), lambda b: (b, 1)),   # K columns
                          pl.BlockSpec((S, D), lambda b: (b, 2))],  # V columns
                out_specs=pl.BlockSpec((S, D), lambda b: (b, 0))),
            compiler_params=_mosaic_params(("parallel",), est_b),
        )(qkv2d, qkv2d, qkv2d)
    else:
        # Fallback for dk not 128-aligned: XLA head split / merge plumbing.
        qkv = qkv2d[:R].reshape(B, S, 3, H, dk).transpose(2, 0, 3, 1, 4)
        q, k, v = qkv[0], qkv[1], qkv[2]
        head_spec = pl.BlockSpec((1, 1, S, dk), lambda b, h: (b, h, 0, 0))
        est_b = 8 * _nbytes((S, dk), mxu_dtype) + 4 * _nbytes((S, S), f32)
        ctx = pl.pallas_call(
            functools.partial(attention_head_kernel, approx_recip=approx_recip),
            out_shape=jax.ShapeDtypeStruct((B, H, S, dk), mxu_dtype),
            grid_spec=pltpu.PrefetchScalarGridSpec(
                num_scalar_prefetch=0,
                grid=(B, H),
                in_specs=[head_spec, head_spec, head_spec],
                out_specs=head_spec),
            compiler_params=_mosaic_params(("parallel", "parallel"), est_b),
        )(q, k, v)
        ctx2d = ctx.transpose(0, 2, 1, 3).reshape(R, D)
        if R_pad != R:
            ctx2d = jnp.pad(ctx2d, ((0, R_pad - R), (0, 0)))

    # ---- kernel C: out-proj + LN1 + residual + FFN (d_ff tiled) + LN2 + residual ----
    tf = ff_tile if ff_tile is not None else _col_tile(dff)
    assert dff % tf == 0
    n_ff = dff // tf
    wbuf = 1 if _buffered_one_supported() else 2
    est_c = (2 * _nbytes((tr, D), mxu_dtype)            # ctx
             + 2 * _nbytes((tr, D), f32)                # x (residual)
             + wbuf * _nbytes((D, D), mxu_dtype)        # wo (grid-invariant)
             + wbuf * _nbytes((6, D), f32)              # packed vectors
             + 2 * _nbytes((D, tf), mxu_dtype)          # w1 tile
             + 2 * _nbytes((1, tf), f32)                # b1 tile
             + 2 * _nbytes((tf, D), mxu_dtype)          # w2 tile
             + 2 * _nbytes((tr, D), f32)                # out
             + 2 * _nbytes((tr, D), f32)                # x1 + acc scratch
             + 2 * _nbytes((tr, tf), f32))              # h intermediate headroom
    out2d = pl.pallas_call(
        functools.partial(post_attn_kernel, mxu_dtype=mxu_dtype),
        out_shape=jax.ShapeDtypeStruct((R_pad, D), f32),
        grid_spec=pltpu.PrefetchScalarGridSpec(
            num_scalar_prefetch=0,
            grid=(n_row, n_ff),
            in_specs=[pl.BlockSpec((tr, D), lambda i, j: (i, 0)),     # ctx
                      pl.BlockSpec((tr, D), lambda i, j: (i, 0)),     # x (residual)
                      _invariant_spec((D, D), lambda i, j: (0, 0)),   # wo
                      _invariant_spec((6, D), lambda i, j: (0, 0)),   # bo/g1/be1/b2/g2/be2
                      pl.BlockSpec((D, tf), lambda i, j: (0, j)),     # w1 tile
                      pl.BlockSpec((1, tf), lambda i, j: (0, j)),     # b1 tile
                      pl.BlockSpec((tf, D), lambda i, j: (j, 0))],    # w2 tile
            out_specs=pl.BlockSpec((tr, D), lambda i, j: (i, 0)),
            scratch_shapes=[pltpu.VMEM((tr, D), f32),                 # x1
                            pltpu.VMEM((tr, D), f32)]),               # ffn accumulator
        compiler_params=_mosaic_params(("parallel", "arbitrary"), est_c),
    )(ctx2d, x2d, wo, vecs, w1, b1, w2)

    return out2d[:R].reshape(B, S, D)


# ---------------------------------------------------------------------------
# plain-JAX reference mirroring the PyTorch forward pass
# ---------------------------------------------------------------------------
def reference_encoder_block(x, params, num_heads):
    B, S, D = x.shape
    dk = D // num_heads
    scale = 1.0 / math.sqrt(dk)
    P = lax.Precision.HIGHEST

    q = jnp.dot(x, params["wq"], precision=P) + params["bq"]
    k = jnp.dot(x, params["wk"], precision=P) + params["bk"]
    v = jnp.dot(x, params["wv"], precision=P) + params["bv"]

    def split(t):  # (B,S,D) -> (B,H,S,dk)
        return t.reshape(B, S, num_heads, dk).transpose(0, 2, 1, 3)

    qh, kh, vh = split(q), split(k), split(v)
    s = jnp.einsum("bhqd,bhkd->bhqk", qh, kh, precision=P) * scale
    p = jax.nn.softmax(s, axis=-1)
    attn = jnp.einsum("bhqk,bhkd->bhqd", p, vh, precision=P)
    attn = attn.transpose(0, 2, 1, 3).reshape(B, S, D)
    attn = jnp.dot(attn, params["wo"], precision=P) + params["bo"]

    x1 = _layer_norm(attn, params["g1"], params["be1"]) + x
    h = jnp.maximum(jnp.dot(x1, params["w1"], precision=P) + params["b1"], 0.0)
    h = jnp.dot(h, params["w2"], precision=P) + params["b2"]
    return _layer_norm(h, params["g2"], params["be2"]) + x1


def init_params(key, d_model, d_ff):
    ks = jax.random.split(key, 8)
    sc = 0.1
    return {
        "wq": sc * jax.random.normal(ks[0], (d_model, d_model), jnp.float32),
        "wk": sc * jax.random.normal(ks[1], (d_model, d_model), jnp.float32),
        "wv": sc * jax.random.normal(ks[2], (d_model, d_model), jnp.float32),
        "wo": sc * jax.random.normal(ks[3], (d_model, d_model), jnp.float32),
        "bq": sc * jax.random.normal(ks[4], (1, d_model), jnp.float32),
        "bk": jnp.zeros((1, d_model), jnp.float32),
        "bv": jnp.zeros((1, d_model), jnp.float32),
        "bo": jnp.zeros((1, d_model), jnp.float32),
        "w1": sc * jax.random.normal(ks[5], (d_model, d_ff), jnp.float32),
        "b1": sc * jax.random.normal(ks[6], (1, d_ff), jnp.float32),
        "w2": sc * jax.random.normal(ks[7], (d_ff, d_model), jnp.float32),
        "b2": jnp.zeros((1, d_model), jnp.float32),
        "g1": jnp.ones((1, d_model), jnp.float32),
        "be1": jnp.zeros((1, d_model), jnp.float32),
        "g2": jnp.ones((1, d_model), jnp.float32),
        "be2": jnp.zeros((1, d_model), jnp.float32),
    }


if __name__ == "__main__":
    # --- config 1: 128-aligned heads -> fast direct-read attention path,
    #     N-tiled QKV weight, d_ff-tiled FFN (ff_tile=256 -> 2 reduction steps). ---
    B, S, D, H, DFF = 2, 64, 256, 2, 512
    kx, kp = jax.random.split(jax.random.PRNGKey(0))
    x = jax.random.normal(kx, (B, S, D), jnp.float32)
    params = init_params(kp, D, DFF)
    ref = reference_encoder_block(x, params, num_heads=H)

    # f32 MXU path (accuracy check).
    out_f32 = encoder_block(x, params, num_heads=H, mxu_dtype=jnp.float32, ff_tile=256)
    out_f32 = jax.block_until_ready(out_f32)
    assert out_f32.shape == (B, S, D)
    assert jnp.allclose(out_f32, ref, atol=1e-3, rtol=1e-3), "f32 kernel mismatch vs reference"

    # default bf16-MXU path (f32 accumulation, f32 softmax / LayerNorm).
    out_bf16 = encoder_block(x, params, num_heads=H, ff_tile=256)
    out_bf16 = jax.block_until_ready(out_bf16)
    assert jnp.allclose(out_bf16, ref, atol=2.5e-1, rtol=5e-2), "bf16 kernel mismatch vs reference"

    # --- config 2: tiny unaligned shapes -> row padding + fallback attention path. ---
    B2, S2, D2, H2, DFF2 = 2, 8, 32, 4, 64
    kx2, kp2 = jax.random.split(jax.random.PRNGKey(1))
    x2 = jax.random.normal(kx2, (B2, S2, D2), jnp.float32)
    params2 = init_params(kp2, D2, DFF2)
    ref2 = reference_encoder_block(x2, params2, num_heads=H2)
    out2 = encoder_block(x2, params2, num_heads=H2, mxu_dtype=jnp.float32)
    out2 = jax.block_until_ready(out2)
    assert jnp.allclose(out2, ref2, atol=1e-3, rtol=1e-3), "fallback-path kernel mismatch"

    print("KERNEL_OK")
</pallas_src>

<mosaic_0001>
module attributes {stable_mosaic.version = 11 : i64} {
  func.func @qkv_proj_kernel(%arg0: i32, %arg1: i32, %arg2: memref<128x256xf32, #tpu.memory_space<vmem>>, %arg3: memref<256x256xf32, #tpu.memory_space<vmem>>, %arg4: memref<1x256xf32, #tpu.memory_space<vmem>>, %arg5: memref<128x256xf32, #tpu.memory_space<vmem>>) attributes {dimension_semantics = [#tpu.dimension_semantics<parallel>, #tpu.dimension_semantics<parallel>], iteration_bounds = array<i64: 1, 3>, scalar_prefetch = 0 : i64, scratch_operands = 0 : i64, tpu.core_type = #tpu.core_type<tc>, window_params = [{transform_indices = @transform_0, window_bounds = array<i64: 128, 256>}, {transform_indices = @transform_1, window_bounds = array<i64: 256, 256>}, {transform_indices = @transform_2, window_bounds = array<i64: 1, 256>}, {transform_indices = @transform_3, window_bounds = array<i64: 128, 256>}]} {
    %c0 = arith.constant 0 : index
    %c0_0 = arith.constant 0 : index
    %0 = vector.load %arg2[%c0, %c0_0] : memref<128x256xf32, #tpu.memory_space<vmem>>, vector<128x256xf32>
    %c0_1 = arith.constant 0 : index
    %c0_2 = arith.constant 0 : index
    %1 = vector.load %arg3[%c0_1, %c0_2] : memref<256x256xf32, #tpu.memory_space<vmem>>, vector<256x256xf32>
    %cst = arith.constant dense<0.000000e+00> : vector<128x256xf32>
    %2 = tpu.matmul %0, %1, %cst {dimension_numbers = #tpu.dot_dimension_numbers<[1], [0], [0], [1], [0, 0, 1, 1], [], []>} : vector<128x256xf32>, vector<256x256xf32>, vector<128x256xf32> -> vector<128x256xf32>
    %c0_3 = arith.constant 0 : index
    %c0_4 = arith.constant 0 : index
    %3 = vector.load %arg4[%c0_3, %c0_4] : memref<1x256xf32, #tpu.memory_space<vmem>>, vector<1x256xf32>
    %4 = vector.broadcast %3 : vector<1x256xf32> to vector<128x256xf32>
    %5 = arith.addf %2, %4 : vector<128x256xf32>
    %c0_5 = arith.constant 0 : index
    %c0_6 = arith.constant 0 : index
    %6 = vector.load %arg5[%c0_5, %c0_6] : memref<128x256xf32, #tpu.memory_space<vmem>>, vector<128x256xf32>
    tpu.vector_store %arg5[%c0_5, %c0_6], %5 {strides = array<i32>} : memref<128x256xf32, #tpu.memory_space<vmem>>, vector<128x256xf32>,
    return
  }
  func.func @transform_0(%arg0: i32, %arg1: i32) -> (i32, i32) {
    %c0_i32 = arith.constant 0 : i32
    %c0_i32_0 = arith.constant 0 : i32
    return %arg0, %c0_i32 : i32, i32
  }
  func.func @transform_1(%arg0: i32, %arg1: i32) -> (i32, i32) {
    %c0_i32 = arith.constant 0 : i32
    %c0_i32_0 = arith.constant 0 : i32
    return %c0_i32, %arg1 : i32, i32
  }
  func.func @transform_2(%arg0: i32, %arg1: i32) -> (i32, i32) {
    %c0_i32 = arith.constant 0 : i32
    %c0_i32_0 = arith.constant 0 : i32
    return %c0_i32, %arg1 : i32, i32
  }
  func.func @transform_3(%arg0: i32, %arg1: i32) -> (i32, i32) {
    %c0_i32 = arith.constant 0 : i32
    return %arg0, %arg1 : i32, i32
  }
}

</mosaic_0001>

<llo_original>
// kernel: tpu_custom_call.1
$region0: #{tpu_custom_call.1}
  #allocation0 [shape = 'u32[]', space=smem, size = 0x4, offset = 0x4, fixed_abs, tag = 'smem constant byte address 0x4 - core index']
  #allocation1 [shape = 'u32[144,128]{1,0:T(1,128)}', space=vmem, size = 0x12000, scoped, tag = 'internal scratch']
  %s0 = inlined_call_operand.hbm [shape: f32[128,256], index: 0, kind: input, shape index: {}]
  %s1 = inlined_call_operand.hbm [shape: f32[256,768], index: 1, kind: input, shape index: {}]
  %s2 = inlined_call_operand.hbm [shape: f32[1,768], index: 2, kind: input, shape index: {}]
  %s3 = inlined_call_operand.hbm [shape: f32[128,768], index: 3, kind: output, shape index: {}]
  %s4 = sld [smem:[#allocation0]]
  $region57: #{tpu_custom_call.1} parent=0
    _
  %s6 = ssub.s32 1, %s4
  %s7 = scalar_select 0, %s6, %s4
  $region1: #{tpu_custom_call.1} parent=0
    #allocation2 [shape = 'u8[131072]{0}', space=vmem, size = 0x20000, scoped, tag = 'input window, operand 0, single buffered']
    #allocation3 [shape = 's32[2]{0}', space=sflag, size = 0x8, scoped, tag = 'scoped memory for tpu_custom_call.1']
    #allocation4 [shape = 's32[2]{0}', space=sflag, size = 0x8, scoped, tag = 'scoped memory for tpu_custom_call.1']
    #allocation5 [shape = 'u8[524288]{0}', space=vmem, size = 0x80000, scoped, tag = 'input window, operand 1']
    #allocation6 [shape = 's32[2]{0}', space=sflag, size = 0x8, scoped, tag = 'scoped memory for tpu_custom_call.1']
    #allocation7 [shape = 'u8[2048]{0}', space=vmem, size = 0x800, scoped, tag = 'input window, operand 2']
    #allocation8 [shape = 'u8[262144]{0}', space=vmem, size = 0x40000, scoped, tag = 'output window, operand 0']
    %8 = vsyncpa [#allocation3], 0
    %9 = vsyncpa [#allocation6], 0
    %s10 = scalar_lea.sflag [#allocation6], 1
    %11 = vsyncpa %s10, 0
    %12 = vsyncpa [#allocation4], 0
    %s13 = scalar_lea.sflag [#allocation4], 1
    %14 = vsyncpa %s13, 0
    loop: start=0, step=1, limit=5
    $region2: #{tpu_custom_call.1} parent=1 // loop_pre_header
      _
    $region3: #{tpu_custom_call.1} parent=1 // loop_header
      %s16 = sphi 0, %s20
      %p17 = scmp.ge.s32.totalorder %s16, 5
      %s23 = sphi 0, %s35
      %s24 = sphi 0, %s31
      %s25 = sphi 0, %s23
      %s26 = sphi 0, %s24
      %s27 = sphi 0, %s25
      %s28 = sphi 0, %s26
      %s38 = sphi 0, %s40
      %s41 = sphi 0, %s38
      %s42 = sphi 0, %s41
      %s58 = sphi 0, %s42
      %s64 = sphi 0, %s66
      %s67 = sphi 0, %s64
      %s68 = sphi 0, %s67
      %s84 = sphi 0, %s68
      %s90 = sphi 0, %s92
      %s93 = sphi 0, %s90
      %s94 = sphi 0, %s93
      %s110 = sphi 0, %s94
      %s118 = sphi 0, %s120
      %s121 = sphi 0, %s118
      %s122 = sphi 0, %s121
      %s138 = sphi 0, %s122
    $region4: #{tpu_custom_call.1} parent=1 // loop_header_branch
      %19 = sbr.rel (%p17) target = $region8
    $region5: #{tpu_custom_call.1} parent=1 // loop_body
      %s21 = ssub.s32 %s16, 1
      %s22 = ssub.s32 %s16, 2
      %s29 = sadd.s32 1, %s24
      %p30 = scmp.ge.s32.totalorder %s29, 3
      %s31 = scalar_select %p30, 0, %s29
      %s32 = sadd.s32 1, %s23
      %s33 = scalar_select %p30, %s32, %s23
      %p34 = scmp.ge.s32.totalorder %s33, 1
      %s35 = scalar_select %p34, 0, %s33
      %s36 = ssub.s32 %s23, %s35
      %p37 = scmp.eq.s32.totalorder %s36, 0
      %s39 = sadd.s32 %s38, 1
      %s40 = scalar_select %p37, %s38, %s39
      %p43 = pneg %p37
      %p44 = scmp.eq.s32.totalorder %s16, 2
      %p45 = por %p43, %p44
      %p46 = scmp.ne.s32.totalorder %s38, %s41
      %p47 = scmp.eq.s32.totalorder %s16, 0
      %p48 = por %p46, %p47
      %p49 = scmp.ne.s32.totalorder %s38, %s41
      %p50 = scmp.eq.s32.totalorder %s21, 2
      %p51 = por %p49, %p50
      %p52 = scmp.ne.s32.totalorder %s41, %s42
      %p53 = scmp.eq.s32.totalorder %s21, 0
      %p54 = por %p52, %p53
      %p55 = scmp.ne.s32.totalorder %s41, %s42
      %p56 = scmp.eq.s32.totalorder %s22, 2
      %p57 = por %p55, %p56
      %p59 = scmp.ne.s32.totalorder %s42, %s58
      %p60 = scmp.eq.s32.totalorder %s22, 0
      %p61 = por %p59, %p60
      %s62 = ssub.s32 %s24, %s31
      %p63 = scmp.eq.s32.totalorder %s62, 0
      %s65 = sadd.s32 %s64, 1
      %s66 = scalar_select %p63, %s64, %s65
      %p69 = pneg %p63
      %p70 = scmp.eq.s32.totalorder %s16, 2
      %p71 = por %p69, %p70
      %p72 = scmp.ne.s32.totalorder %s64, %s67
      %p73 = scmp.eq.s32.totalorder %s16, 0
      %p74 = por %p72, %p73
      %p75 = scmp.ne.s32.totalorder %s64, %s67
      %p76 = scmp.eq.s32.totalorder %s21, 2
      %p77 = por %p75, %p76
      %p78 = scmp.ne.s32.totalorder %s67, %s68
      %p79 = scmp.eq.s32.totalorder %s21, 0
      %p80 = por %p78, %p79
      %p81 = scmp.ne.s32.totalorder %s67, %s68
      %p82 = scmp.eq.s32.totalorder %s22, 2
      %p83 = por %p81, %p82
      %p85 = scmp.ne.s32.totalorder %s68, %s84
      %p86 = scmp.eq.s32.totalorder %s22, 0
      %p87 = por %p85, %p86
      %s88 = ssub.s32 %s24, %s31
      %p89 = scmp.eq.s32.totalorder %s88, 0
      %s91 = sadd.s32 %s90, 1
      %s92 = scalar_select %p89, %s90, %s91
      %p95 = pneg %p89
      %p96 = scmp.eq.s32.totalorder %s16, 2
      %p97 = por %p95, %p96
      %p98 = scmp.ne.s32.totalorder %s90, %s93
      %p99 = scmp.eq.s32.totalorder %s16, 0
      %p100 = por %p98, %p99
      %p101 = scmp.ne.s32.totalorder %s90, %s93
      %p102 = scmp.eq.s32.totalorder %s21, 2
      %p103 = por %p101, %p102
      %p104 = scmp.ne.s32.totalorder %s93, %s94
      %p105 = scmp.eq.s32.totalorder %s21, 0
      %p106 = por %p104, %p105
      %p107 = scmp.ne.s32.totalorder %s93, %s94
      %p108 = scmp.eq.s32.totalorder %s22, 2
      %p109 = por %p107, %p108
      %p111 = scmp.ne.s32.totalorder %s94, %s110
      %p112 = scmp.eq.s32.totalorder %s22, 0
      %p113 = por %p111, %p112
      %s114 = ssub.s32 %s23, %s35
      %s115 = ssub.s32 %s24, %s31
      %s116 = sor.u32 %s114, %s115
      %p117 = scmp.eq.s32.totalorder %s116, 0
      %s119 = sadd.s32 %s118, 1
      %s120 = scalar_select %p117, %s118, %s119
      %p123 = pneg %p117
      %p124 = scmp.eq.s32.totalorder %s16, 2
      %p125 = por %p123, %p124
      %p126 = scmp.ne.s32.totalorder %s118, %s121
      %p127 = scmp.eq.s32.totalorder %s16, 0
      %p128 = por %p126, %p127
      %p129 = scmp.ne.s32.totalorder %s118, %s121
      %p130 = scmp.eq.s32.totalorder %s21, 2
      %p131 = por %p129, %p130
      %p132 = scmp.ne.s32.totalorder %s121, %s122
      %p133 = scmp.eq.s32.totalorder %s21, 0
      %p134 = por %p132, %p133
      %p135 = scmp.ne.s32.totalorder %s121, %s122
      %p136 = scmp.eq.s32.totalorder %s22, 2
      %p137 = por %p135, %p136
      %p139 = scmp.ne.s32.totalorder %s122, %s138
      %p140 = scmp.eq.s32.totalorder %s22, 0
      %p141 = por %p139, %p140
      %p142 = scmp.le.s32.totalorder 1, %s16
      %p143 = scmp.lt.s32.totalorder %s16, 4
      %p144 = pnand %p142, %p143
      %p145 = pneg %p144
      // Predicated region
      $region9: #{tpu_custom_call.1} parent=5 // pred_check
        _
      $region10: #{tpu_custom_call.1} parent=5 // pred_check_branch
        %147 = sbr.rel (%p144) target = $region12
      $region11: #{tpu_custom_call.1} parent=5 // pred_region
        %s148 = ssub.s32 %s16, 1
        // Predicated region
        $region13: #{tpu_custom_call.1} parent=11 // pred_check
          %p149 = pneg %p54
        $region14: #{tpu_custom_call.1} parent=11 // pred_check_branch
          %151 = sbr.rel (%p149) target = $region16
        $region15: #{tpu_custom_call.1} parent=11 // pred_region
          %s152 = smul.u32 16, %s25
          %s154 = ssub.s32 4096, 4096
          %155 = vsyncadd [#allocation3], %s154
          %s156 = smul.addr %s152, 2
          %s157 = smul.addr %s156, 128
          %s158 = scalar_lea.hbm %s0, %s157
          %s159 = sshll.u32 [#allocation2], 4
          %s160 = int_to_ptr.vmem [resolvable:$true] %s159
          %165 = dma.hbm_to_vmem [thread:$0]  %s158, 4096, %s160, [#allocation3], 256, 256, 16
        $region16: #{tpu_custom_call.1} parent=11 // pred_fallthru
          _
      $region12: #{tpu_custom_call.1} parent=5 // pred_fallthru
        _
      %p166 = scmp.lt.s32.totalorder %s16, 3
      // Predicated region
      $region17: #{tpu_custom_call.1} parent=5 // pred_check
        %p167 = pneg %p166
      $region18: #{tpu_custom_call.1} parent=5 // pred_check_branch
        %169 = sbr.rel (%p167) target = $region20
      $region19: #{tpu_custom_call.1} parent=5 // pred_region
        // Predicated region
        $region21: #{tpu_custom_call.1} parent=19 // pred_check
          %p170 = pneg %p74
        $region22: #{tpu_custom_call.1} parent=19 // pred_check_branch
          %172 = sbr.rel (%p170) target = $region24
        $region23: #{tpu_custom_call.1} parent=19 // pred_region
          %s173 = sand.u32 %s16, 1
          %s174 = scalar_lea.sflag [#allocation6], %s173
          %s175 = sand.u32 %s64, 1
          %s176 = smul.addr %s175, 512
          %s177 = scalar_lea.vmem [#allocation5], %s176
          %s178 = smul.u32 2, %s24
          %s180 = ssub.s32 8192, 8192
          %181 = vsyncadd %s174, %s180
          %s182 = smul.addr %s178, 128
          %s183 = scalar_lea.hbm %s1, %s182
          %s184 = sshll.u32 %s177, 4
          %s185 = int_to_ptr.vmem [resolvable:$true] %s184
          %190 = dma.hbm_to_vmem [thread:$0]  %s183, 8192, %s185, %s174, 768, 256, 16
        $region24: #{tpu_custom_call.1} parent=19 // pred_fallthru
          _
        // Predicated region
        $region25: #{tpu_custom_call.1} parent=19 // pred_check
          %p191 = pneg %p100
        $region26: #{tpu_custom_call.1} parent=19 // pred_check_branch
          %193 = sbr.rel (%p191) target = $region28
        $region27: #{tpu_custom_call.1} parent=19 // pred_region
          %s194 = sand.u32 %s16, 1
          %s195 = scalar_lea.sflag [#allocation6], %s194
          %s196 = sand.u32 %s90, 1
          %s197 = smul.addr %s196, 2
          %s198 = scalar_lea.vmem [#allocation7], %s197
          %s199 = smul.u32 2, %s24
          %s201 = ssub.s32 32, 32
          %202 = vsyncadd %s195, %s201
          %s203 = smul.addr %s199, 16
          %s204 = scalar_lea.hbm %s2, %s203
          %s206 = sshll.u32 %s198, 4
          %s207 = int_to_ptr.vmem [resolvable:$true] %s206
          %209 = dma.hbm_to_vmem [thread:$0]  %s204, 32, %s207, %s195
        $region28: #{tpu_custom_call.1} parent=19 // pred_fallthru
          _
      $region20: #{tpu_custom_call.1} parent=5 // pred_fallthru
        _
      %p210 = scmp.le.s32.totalorder 1, %s16
      %p211 = scmp.lt.s32.totalorder %s16, 4
      %p212 = pnand %p210, %p211
      %p213 = pneg %p212
      // Predicated region
      $region29: #{tpu_custom_call.1} parent=5 // pred_check
        _
      $region30: #{tpu_custom_call.1} parent=5 // pred_check_branch
        %215 = sbr.rel (%p212) target = $region32
      $region31: #{tpu_custom_call.1} parent=5 // pred_region
        %s216 = ssub.s32 %s16, 1
        // Predicated region
        $region33: #{tpu_custom_call.1} parent=31 // pred_check
          %p217 = pneg %p54
        $region34: #{tpu_custom_call.1} parent=31 // pred_check_branch
          %219 = sbr.rel (%p217) target = $region36
        $region35: #{tpu_custom_call.1} parent=31 // pred_region
          %220 = dma.done [#allocation3], 4096
        $region36: #{tpu_custom_call.1} parent=31 // pred_fallthru
          _
        %s221 = sand.u32 %s21, 1
        %s222 = scalar_lea.sflag [#allocation6], %s221
        %s223 = sand.u32 %s67, 1
        %s224 = smul.addr %s223, 512
        %s225 = scalar_lea.vmem [#allocation5], %s224
        // Predicated region
        $region37: #{tpu_custom_call.1} parent=31 // pred_check
          %p226 = pneg %p80
        $region38: #{tpu_custom_call.1} parent=31 // pred_check_branch
          %228 = sbr.rel (%p226) target = $region40
        $region39: #{tpu_custom_call.1} parent=31 // pred_region
          %229 = dma.done %s222, 8192
        $region40: #{tpu_custom_call.1} parent=31 // pred_fallthru
          _
        %s230 = sand.u32 %s21, 1
        %s231 = scalar_lea.sflag [#allocation6], %s230
        %s232 = sand.u32 %s93, 1
        %s233 = smul.addr %s232, 2
        %s234 = scalar_lea.vmem [#allocation7], %s233
        // Predicated region
        $region41: #{tpu_custom_call.1} parent=31 // pred_check
          %p235 = pneg %p106
        $region42: #{tpu_custom_call.1} parent=31 // pred_check_branch
          %237 = sbr.rel (%p235) target = $region44
        $region43: #{tpu_custom_call.1} parent=31 // pred_region
          %238 = dma.done %s231, 32
        $region44: #{tpu_custom_call.1} parent=31 // pred_fallthru
          _
        %p239 = pneg %p54
        %p240 = pneg %p51
        %s241 = sand.u32 %s21, 1
        %s242 = scalar_lea.sflag [#allocation6], %s241
        %s243 = sand.u32 %s67, 1
        %s244 = smul.addr %s243, 512
        %s245 = scalar_lea.vmem [#allocation5], %s244
        %p246 = pneg %p80
        %p247 = pneg %p77
        %s248 = sand.u32 %s21, 1
        %s249 = scalar_lea.sflag [#allocation6], %s248
        %s250 = sand.u32 %s93, 1
        %s251 = smul.addr %s250, 2
        %s252 = scalar_lea.vmem [#allocation7], %s251
        %p253 = pneg %p106
        %p254 = pneg %p103
        %p255 = pneg %p134
        %p256 = pneg %p131
        %s257 = sand.u32 %s121, 1
        %s258 = scalar_lea.sflag [#allocation4], %s257
        %s259 = sand.u32 %s121, 1
        %s260 = smul.addr %s259, 256
        %s261 = scalar_lea.vmem [#allocation8], %s260
        %s262 = smul.u32 16, %s25
        %s263 = smul.u32 2, %s26
        %s264 = smul.u32 2, %s26
        %s265 = smul.u32 16, %s25
        %s266 = smul.u32 2, %s26
        %v267 = vld [vmem:[#allocation2] sm:$0xff]
        %v268 = vld [vmem:[#allocation2 + $0x8] sm:$0xff]
        %v269 = vld [vmem:[#allocation2 + $0x10] sm:$0xff]
        %v270 = vld [vmem:[#allocation2 + $0x18] sm:$0xff]
        %v271 = vld [vmem:[#allocation2 + $0x20] sm:$0xff]
        %v272 = vld [vmem:[#allocation2 + $0x28] sm:$0xff]
        %v273 = vld [vmem:[#allocation2 + $0x30] sm:$0xff]
        %v274 = vld [vmem:[#allocation2 + $0x38] sm:$0xff]
        %v275 = vld [vmem:[#allocation2 + $0x40] sm:$0xff]
        %v276 = vld [vmem:[#allocation2 + $0x48] sm:$0xff]
        %v277 = vld [vmem:[#allocation2 + $0x50] sm:$0xff]
        %v278 = vld [vmem:[#allocation2 + $0x58] sm:$0xff]
        %v279 = vld [vmem:[#allocation2 + $0x60] sm:$0xff]
        %v280 = vld [vmem:[#allocation2 + $0x68] sm:$0xff]
        %v281 = vld [vmem:[#allocation2 + $0x70] sm:$0xff]
        %v282 = vld [vmem:[#allocation2 + $0x78] sm:$0xff]
        %v283 = vld [vmem:[#allocation2 + $0x80] sm:$0xff]
        %v284 = vld [vmem:[#allocation2 + $0x88] sm:$0xff]
        %v285 = vld [vmem:[#allocation2 + $0x90] sm:$0xff]
        %v286 = vld [vmem:[#allocation2 + $0x98] sm:$0xff]
        %v287 = vld [vmem:[#allocation2 + $0xa0] sm:$0xff]
        %v288 = vld [vmem:[#allocation2 + $0xa8] sm:$0xff]
        %v289 = vld [vmem:[#allocation2 + $0xb0] sm:$0xff]
        %v290 = vld [vmem:[#allocation2 + $0xb8] sm:$0xff]
        %v291 = vld [vmem:[#allocation2 + $0xc0] sm:$0xff]
        %v292 = vld [vmem:[#allocation2 + $0xc8] sm:$0xff]
        %v293 = vld [vmem:[#allocation2 + $0xd0] sm:$0xff]
        %v294 = vld [vmem:[#allocation2 + $0xd8] sm:$0xff]
        %v295 = vld [vmem:[#allocation2 + $0xe0] sm:$0xff]
        %v296 = vld [vmem:[#allocation2 + $0xe8] sm:$0xff]
        %v297 = vld [vmem:[#allocation2 + $0xf0] sm:$0xff]
        %v298 = vld [vmem:[#allocation2 + $0xf8] sm:$0xff]
        %v299 = vld [vmem:[%s225] sm:$0xff]
        %v300 = vld [vmem:[%s225 + $0x8] sm:$0xff]
        %v301 = vld [vmem:[%s225 + $0x10] sm:$0xff]
        %v302 = vld [vmem:[%s225 + $0x18] sm:$0xff]
        %v303 = vld [vmem:[%s225 + $0x20] sm:$0xff]
        %v304 = vld [vmem:[%s225 + $0x28] sm:$0xff]
        %v305 = vld [vmem:[%s225 + $0x30] sm:$0xff]
        %v306 = vld [vmem:[%s225 + $0x38] sm:$0xff]
        %v307 = vld [vmem:[%s225 + $0x40] sm:$0xff]
        %v308 = vld [vmem:[%s225 + $0x48] sm:$0xff]
        %v309 = vld [vmem:[%s225 + $0x50] sm:$0xff]
        %v310 = vld [vmem:[%s225 + $0x58] sm:$0xff]
        %v311 = vld [vmem:[%s225 + $0x60] sm:$0xff]
        %v312 = vld [vmem:[%s225 + $0x68] sm:$0xff]
        %v313 = vld [vmem:[%s225 + $0x70] sm:$0xff]
        %v314 = vld [vmem:[%s225 + $0x78] sm:$0xff]
        %v315 = vld [vmem:[%s225 + $0x80] sm:$0xff]
        %v316 = vld [vmem:[%s225 + $0x88] sm:$0xff]
        %v317 = vld [vmem:[%s225 + $0x90] sm:$0xff]
        %v318 = vld [vmem:[%s225 + $0x98] sm:$0xff]
        %v319 = vld [vmem:[%s225 + $0xa0] sm:$0xff]
        %v320 = vld [vmem:[%s225 + $0xa8] sm:$0xff]
        %v321 = vld [vmem:[%s225 + $0xb0] sm:$0xff]
        %v322 = vld [vmem:[%s225 + $0xb8] sm:$0xff]
        %v323 = vld [vmem:[%s225 + $0xc0] sm:$0xff]
        %v324 = vld [vmem:[%s225 + $0xc8] sm:$0xff]
        %v325 = vld [vmem:[%s225 + $0xd0] sm:$0xff]
        %v326 = vld [vmem:[%s225 + $0xd8] sm:$0xff]
        %v327 = vld [vmem:[%s225 + $0xe0] sm:$0xff]
        %v328 = vld [vmem:[%s225 + $0xe8] sm:$0xff]
        %v329 = vld [vmem:[%s225 + $0xf0] sm:$0xff]
        %v330 = vld [vmem:[%s225 + $0xf8] sm:$0xff]
        %v331 = vld [vmem:[%s225 + $0x100] sm:$0xff]
        %v332 = vld [vmem:[%s225 + $0x108] sm:$0xff]
        %v333 = vld [vmem:[%s225 + $0x110] sm:$0xff]
        %v334 = vld [vmem:[%s225 + $0x118] sm:$0xff]
        %v335 = vld [vmem:[%s225 + $0x120] sm:$0xff]
        %v336 = vld [vmem:[%s225 + $0x128] sm:$0xff]
        %v337 = vld [vmem:[%s225 + $0x130] sm:$0xff]
        %v338 = vld [vmem:[%s225 + $0x138] sm:$0xff]
        %v339 = vld [vmem:[%s225 + $0x140] sm:$0xff]
        %v340 = vld [vmem:[%s225 + $0x148] sm:$0xff]
        %v341 = vld [vmem:[%s225 + $0x150] sm:$0xff]
        %v342 = vld [vmem:[%s225 + $0x158] sm:$0xff]
        %v343 = vld [vmem:[%s225 + $0x160] sm:$0xff]
        %v344 = vld [vmem:[%s225 + $0x168] sm:$0xff]
        %v345 = vld [vmem:[%s225 + $0x170] sm:$0xff]
        %v346 = vld [vmem:[%s225 + $0x178] sm:$0xff]
        %v347 = vld [vmem:[%s225 + $0x180] sm:$0xff]
        %v348 = vld [vmem:[%s225 + $0x188] sm:$0xff]
        %v349 = vld [vmem:[%s225 + $0x190] sm:$0xff]
        %v350 = vld [vmem:[%s225 + $0x198] sm:$0xff]
        %v351 = vld [vmem:[%s225 + $0x1a0] sm:$0xff]
        %v352 = vld [vmem:[%s225 + $0x1a8] sm:$0xff]
        %v353 = vld [vmem:[%s225 + $0x1b0] sm:$0xff]
        %v354 = vld [vmem:[%s225 + $0x1b8] sm:$0xff]
        %v355 = vld [vmem:[%s225 + $0x1c0] sm:$0xff]
        %v356 = vld [vmem:[%s225 + $0x1c8] sm:$0xff]
        %v357 = vld [vmem:[%s225 + $0x1d0] sm:$0xff]
        %v358 = vld [vmem:[%s225 + $0x1d8] sm:$0xff]
        %v359 = vld [vmem:[%s225 + $0x1e0] sm:$0xff]
        %v360 = vld [vmem:[%s225 + $0x1e8] sm:$0xff]
        %v361 = vld [vmem:[%s225 + $0x1f0] sm:$0xff]
        %v362 = vld [vmem:[%s225 + $0x1f8] sm:$0xff]
        %v363 = vld [vmem:[%s234] sm:$0x3]
        %v365 = vlaneseq
        %v366 = vshrl.u32 %v365, 7
        %v367 = vsub.s32 0, %v366
        %v368 = vrot.slane %v363, %v367
        %v369 = vlaneseq
        %v370 = vshrl.u32 %v369, 7
        %v371 = vsub.s32 1, %v370
        %v372 = vrot.slane %v363, %v371
        %375 = vmatprep.subr.mxu0 %v330
        %376 = vmatpush1.msra.mxu0 %v329
        %377 = vmatprep.subr.mxu0 %v328
        %378 = vmatpush1.msra.mxu0 %v327
        %379 = vmatprep.subr.mxu0 %v326
        %380 = vmatpush1.msra.mxu0 %v325
        %381 = vmatprep.subr.mxu0 %v324
        %382 = vmatpush1.msra.mxu0 %v323
        %383 = vmatprep.subr.mxu0 %v322
        %384 = vmatpush1.msra.mxu0 %v321
        %385 = vmatprep.subr.mxu0 %v320
        %386 = vmatpush1.msra.mxu0 %v319
        %387 = vmatprep.subr.mxu0 %v318
        %388 = vmatpush1.msra.mxu0 %v317
        %389 = vmatprep.subr.mxu0 %v316
        %390 = vmatpush1.msra.mxu0 %v315
        %391 = vmatprep.subr.mxu0 %v314
        %392 = vmatpush1.msra.mxu0 %v313
        %393 = vmatprep.subr.mxu0 %v312
        %394 = vmatpush1.msra.mxu0 %v311
        %395 = vmatprep.subr.mxu0 %v310
        %396 = vmatpush1.msra.mxu0 %v309
        %397 = vmatprep.subr.mxu0 %v308
        %398 = vmatpush1.msra.mxu0 %v307
        %399 = vmatprep.subr.mxu0 %v306
        %400 = vmatpush1.msra.mxu0 %v305
        %401 = vmatprep.subr.mxu0 %v304
        %402 = vmatpush1.msra.mxu0 %v303
        %403 = vmatprep.subr.mxu0 %v302
        %404 = vmatpush1.msra.mxu0 %v301
        %405 = vmatprep.subr.mxu0 %v300
        %406 = vmatpush1.msra.mxu0 %v299
        %407 = vmatprep.subr.mxu0 %v362
        %408 = vmatpush2.msra.mxu0 %v361
        %409 = vmatprep.subr.mxu0 %v360
        %410 = vmatpush2.msra.mxu0 %v359
        %411 = vmatprep.subr.mxu0 %v358
        %412 = vmatpush2.msra.mxu0 %v357
        %413 = vmatprep.subr.mxu0 %v356
        %414 = vmatpush2.msra.mxu0 %v355
        %415 = vmatprep.subr.mxu0 %v354
        %416 = vmatpush2.msra.mxu0 %v353
        %417 = vmatprep.subr.mxu0 %v352
        %418 = vmatpush2.msra.mxu0 %v351
        %419 = vmatprep.subr.mxu0 %v350
        %420 = vmatpush2.msra.mxu0 %v349
        %421 = vmatprep.subr.mxu0 %v348
        %422 = vmatpush2.msra.mxu0 %v347
        %423 = vmatprep.subr.mxu0 %v346
        %424 = vmatpush2.msra.mxu0 %v345
        %425 = vmatprep.subr.mxu0 %v344
        %426 = vmatpush2.msra.mxu0 %v343
        %427 = vmatprep.subr.mxu0 %v342
        %428 = vmatpush2.msra.mxu0 %v341
        %429 = vmatprep.subr.mxu0 %v340
        %430 = vmatpush2.msra.mxu0 %v339
        %431 = vmatprep.subr.mxu0 %v338
        %432 = vmatpush2.msra.mxu0 %v337
        %433 = vmatprep.subr.mxu0 %v336
        %434 = vmatpush2.msra.mxu0 %v335
        %435 = vmatprep.subr.mxu0 %v334
        %436 = vmatpush2.msra.mxu0 %v333
        %437 = vmatprep.subr.mxu0 %v332
        %438 = vmatpush2.msra.mxu0 %v331
        %439 = vmatprep.mubr.f32.mxu0 %v268
        %440 = vmatmul.mubr.f32.gmra.mxu0 %v267
        %v441 = vpop.f32.mrf.mxu0
        %v442 = vadd.f32 %v368, %v441
        %v443 = vpop.f32.mrf.mxu0
        %v444 = vadd.f32 %v372, %v443
        %445 = vmatprep.mubr.f32.mxu0 %v270
        %446 = vmatmul.mubr.f32.gmra.mxu0 %v269
        %v447 = vpop.f32.mrf.mxu0
        %v448 = vadd.f32 %v368, %v447
        %v449 = vpop.f32.mrf.mxu0
        %v450 = vadd.f32 %v372, %v449
        %451 = vmatprep.mubr.f32.mxu0 %v272
        %452 = vmatmul.mubr.f32.gmra.mxu0 %v271
        %v453 = vpop.f32.mrf.mxu0
        %v454 = vadd.f32 %v368, %v453
        %v455 = vpop.f32.mrf.mxu0
        %v456 = vadd.f32 %v372, %v455
        %457 = vmatprep.mubr.f32.mxu0 %v274
        %458 = vmatmul.mubr.f32.gmra.mxu0 %v273
        %v459 = vpop.f32.mrf.mxu0
        %v460 = vadd.f32 %v368, %v459
        %v461 = vpop.f32.mrf.mxu0
        %v462 = vadd.f32 %v372, %v461
        %463 = vmatprep.mubr.f32.mxu0 %v276
        %464 = vmatmul.mubr.f32.gmra.mxu0 %v275
        %v465 = vpop.f32.mrf.mxu0
        %v466 = vadd.f32 %v368, %v465
        %v467 = vpop.f32.mrf.mxu0
        %v468 = vadd.f32 %v372, %v467
        %469 = vmatprep.mubr.f32.mxu0 %v278
        %470 = vmatmul.mubr.f32.gmra.mxu0 %v277
        %v471 = vpop.f32.mrf.mxu0
        %v472 = vadd.f32 %v368, %v471
        %v473 = vpop.f32.mrf.mxu0
        %v474 = vadd.f32 %v372, %v473
        %475 = vmatprep.mubr.f32.mxu0 %v280
        %476 = vmatmul.mubr.f32.gmra.mxu0 %v279
        %v477 = vpop.f32.mrf.mxu0
        %v478 = vadd.f32 %v368, %v477
        %v479 = vpop.f32.mrf.mxu0
        %v480 = vadd.f32 %v372, %v479
        %481 = vmatprep.mubr.f32.mxu0 %v282
        %482 = vmatmul.mubr.f32.gmra.mxu0 %v281
        %v483 = vpop.f32.mrf.mxu0
        %v484 = vadd.f32 %v368, %v483
        %v485 = vpop.f32.mrf.mxu0
        %v486 = vadd.f32 %v372, %v485
        %487 = vmatprep.mubr.f32.mxu0 %v284
        %488 = vmatmul.mubr.f32.gmra.mxu0 %v283
        %v489 = vpop.f32.mrf.mxu0
        %v490 = vadd.f32 %v368, %v489
        %v491 = vpop.f32.mrf.mxu0
        %v492 = vadd.f32 %v372, %v491
        %493 = vmatprep.mubr.f32.mxu0 %v286
        %494 = vmatmul.mubr.f32.gmra.mxu0 %v285
        %v495 = vpop.f32.mrf.mxu0
        %v496 = vadd.f32 %v368, %v495
        %v497 = vpop.f32.mrf.mxu0
        %v498 = vadd.f32 %v372, %v497
        %499 = vmatprep.mubr.f32.mxu0 %v288
        %500 = vmatmul.mubr.f32.gmra.mxu0 %v287
        %v501 = vpop.f32.mrf.mxu0
        %v502 = vadd.f32 %v368, %v501
        %v503 = vpop.f32.mrf.mxu0
        %v504 = vadd.f32 %v372, %v503
        %505 = vmatprep.mubr.f32.mxu0 %v290
        %506 = vmatmul.mubr.f32.gmra.mxu0 %v289
        %v507 = vpop.f32.mrf.mxu0
        %v508 = vadd.f32 %v368, %v507
        %v509 = vpop.f32.mrf.mxu0
        %v510 = vadd.f32 %v372, %v509
        %511 = vmatprep.mubr.f32.mxu0 %v292
        %512 = vmatmul.mubr.f32.gmra.mxu0 %v291
        %v513 = vpop.f32.mrf.mxu0
        %v514 = vadd.f32 %v368, %v513
        %v515 = vpop.f32.mrf.mxu0
        %v516 = vadd.f32 %v372, %v515
        %517 = vmatprep.mubr.f32.mxu0 %v294
        %518 = vmatmul.mubr.f32.gmra.mxu0 %v293
        %v519 = vpop.f32.mrf.mxu0
        %v520 = vadd.f32 %v368, %v519
        %v521 = vpop.f32.mrf.mxu0
        %v522 = vadd.f32 %v372, %v521
        %523 = vmatprep.mubr.f32.mxu0 %v296
        %524 = vmatmul.mubr.f32.gmra.mxu0 %v295
        %v525 = vpop.f32.mrf.mxu0
        %v526 = vadd.f32 %v368, %v525
        %v527 = vpop.f32.mrf.mxu0
        %v528 = vadd.f32 %v372, %v527
        %529 = vmatprep.mubr.f32.mxu0 %v298
        %530 = vmatmul.mubr.f32.gmra.mxu0 %v297
        %v531 = vpop.f32.mrf.mxu0
        %v532 = vadd.f32 %v368, %v531
        %v533 = vpop.f32.mrf.mxu0
        %v534 = vadd.f32 %v372, %v533
        %535 = vdwg.mxu0
        %536 = vst [vmem:[%s261] sm:$0xff] %v442
        %537 = vst [vmem:[%s261 + $0x8] sm:$0xff] %v444
        %538 = vst [vmem:[%s261 + $0x10] sm:$0xff] %v448
        %539 = vst [vmem:[%s261 + $0x18] sm:$0xff] %v450
        %540 = vst [vmem:[%s261 + $0x20] sm:$0xff] %v454
        %541 = vst [vmem:[%s261 + $0x28] sm:$0xff] %v456
        %542 = vst [vmem:[%s261 + $0x30] sm:$0xff] %v460
        %543 = vst [vmem:[%s261 + $0x38] sm:$0xff] %v462
        %544 = vst [vmem:[%s261 + $0x40] sm:$0xff] %v466
        %545 = vst [vmem:[%s261 + $0x48] sm:$0xff] %v468
        %546 = vst [vmem:[%s261 + $0x50] sm:$0xff] %v472
        %547 = vst [vmem:[%s261 + $0x58] sm:$0xff] %v474
        %548 = vst [vmem:[%s261 + $0x60] sm:$0xff] %v478
        %549 = vst [vmem:[%s261 + $0x68] sm:$0xff] %v480
        %550 = vst [vmem:[%s261 + $0x70] sm:$0xff] %v484
        %551 = vst [vmem:[%s261 + $0x78] sm:$0xff] %v486
        %552 = vst [vmem:[%s261 + $0x80] sm:$0xff] %v490
        %553 = vst [vmem:[%s261 + $0x88] sm:$0xff] %v492
        %554 = vst [vmem:[%s261 + $0x90] sm:$0xff] %v496
        %555 = vst [vmem:[%s261 + $0x98] sm:$0xff] %v498
        %556 = vst [vmem:[%s261 + $0xa0] sm:$0xff] %v502
        %557 = vst [vmem:[%s261 + $0xa8] sm:$0xff] %v504
        %558 = vst [vmem:[%s261 + $0xb0] sm:$0xff] %v508
        %559 = vst [vmem:[%s261 + $0xb8] sm:$0xff] %v510
        %560 = vst [vmem:[%s261 + $0xc0] sm:$0xff] %v514
        %561 = vst [vmem:[%s261 + $0xc8] sm:$0xff] %v516
        %562 = vst [vmem:[%s261 + $0xd0] sm:$0xff] %v520
        %563 = vst [vmem:[%s261 + $0xd8] sm:$0xff] %v522
        %564 = vst [vmem:[%s261 + $0xe0] sm:$0xff] %v526
        %565 = vst [vmem:[%s261 + $0xe8] sm:$0xff] %v528
        %566 = vst [vmem:[%s261 + $0xf0] sm:$0xff] %v532
        %567 = vst [vmem:[%s261 + $0xf8] sm:$0xff] %v534
        %s568 = sand.u32 %s121, 1
        %s569 = scalar_lea.sflag [#allocation4], %s568
        %s570 = sand.u32 %s121, 1
        %s571 = smul.addr %s570, 256
        %s572 = scalar_lea.vmem [#allocation8], %s571
        // Predicated region
        $region45: #{tpu_custom_call.1} parent=31 // pred_check
          %p573 = pneg %p131
        $region46: #{tpu_custom_call.1} parent=31 // pred_check_branch
          %575 = sbr.rel (%p573) target = $region48
        $region47: #{tpu_custom_call.1} parent=31 // pred_region
          %s576 = smul.u32 16, %s25
          %s577 = smul.u32 2, %s26
          %s579 = ssub.s32 4096, 4096
          %580 = vsyncadd %s569, %s579
          %s581 = smul.addr %s576, 6
          %s582 = sadd.s32 %s577, %s581
          %s583 = smul.addr %s582, 128
          %s584 = scalar_lea.hbm %s3, %s583
          %s585 = sshll.u32 %s572, 4
          %s586 = int_to_ptr.vmem [resolvable:$true] %s585
          %591 = dma.vmem_to_hbm [thread:$0]  %s586, 4096, %s584, %s569, 256, 768, 16
        $region48: #{tpu_custom_call.1} parent=31 // pred_fallthru
          _
      $region32: #{tpu_custom_call.1} parent=5 // pred_fallthru
        _
      %p592 = scmp.le.s32.totalorder 2, %s16
      // Predicated region
      $region49: #{tpu_custom_call.1} parent=5 // pred_check
        %p593 = pneg %p592
      $region50: #{tpu_custom_call.1} parent=5 // pred_check_branch
        %595 = sbr.rel (%p593) target = $region52
      $region51: #{tpu_custom_call.1} parent=5 // pred_region
        %s596 = ssub.s32 %s16, 2
        // Predicated region
        $region53: #{tpu_custom_call.1} parent=51 // pred_check
          %p597 = pneg %p137
        $region54: #{tpu_custom_call.1} parent=51 // pred_check_branch
          %599 = sbr.rel (%p597) target = $region56
        $region55: #{tpu_custom_call.1} parent=51 // pred_region
          %s600 = sand.u32 %s122, 1
          %s601 = scalar_lea.sflag [#allocation4], %s600
          %s602 = sand.u32 %s122, 1
          %s603 = smul.addr %s602, 256
          %s604 = scalar_lea.vmem [#allocation8], %s603
          %605 = dma.done %s601, 4096
        $region56: #{tpu_custom_call.1} parent=51 // pred_fallthru
          _
      $region52: #{tpu_custom_call.1} parent=5 // pred_fallthru
        _
    $region6: #{tpu_custom_call.1} parent=1 // loop_footer
      %s20 = sadd.s32 1, %s16
    $region7: #{tpu_custom_call.1} parent=1 // loop_footer_branch
      %15 = sbr.rel target = $region3
    $region8: #{tpu_custom_call.1} parent=1 // loop_exit
      _
    %606 = vsyncpa [#allocation3], 1
    %s607 = scalar_lea.sflag [#allocation3], 1
    %608 = vsyncpa %s607, 1
    %609 = vsyncpa [#allocation6], 1
    %s610 = scalar_lea.sflag [#allocation6], 1
    %611 = vsyncpa %s610, 1
    %612 = vsyncpa [#allocation4], 1
    %s613 = scalar_lea.sflag [#allocation4], 1
    %614 = vsyncpa %s613, 1

</llo_original>
